<compile_context>
chip_gen: v6e
topology: v6e:2x2x1
jax: 0.10.0
libtpu: 0.0.40
codegen_flags: <defaults>
</compile_context>

<pallas_src>
from functools import partial

import jax
import jax.numpy as jnp
from jax.experimental import pallas as pl
from jax.experimental.pallas import tpu as pltpu


def _add_kernel(x_ref, y_ref, o_ref):
    """Single VPU sweep over one lane-dense block."""
    o_ref[...] = x_ref[...] + y_ref[...]


def add_forward(x, y, *, lane_cols=1024, row_block=512):
    """Pallas implementation of Add.forward: returns x + y (same shape/dtype rules as torch)."""
    assert x.shape == y.shape, "Add requires equal shapes (broadcasting not needed by the module)"
    out_dtype = jnp.result_type(x.dtype, y.dtype)
    x = x.astype(out_dtype)
    y = y.astype(out_dtype)

    orig_shape = x.shape
    total = x.size
    if total == 0:
        return jnp.zeros(orig_shape, out_dtype)

    # Lane-dense 2D layout: last dim = lane_cols (multiple of 128) -> unmasked vst.
    cols = lane_cols
    rows = pl.cdiv(total, cols)
    rb = min(row_block, rows)                 # block rows (full dim if small)
    rows_padded = pl.cdiv(rows, rb) * rb
    padded_total = rows_padded * cols

    xf = x.reshape(-1)
    yf = y.reshape(-1)
    if padded_total != total:
        pad = padded_total - total
        xf = jnp.pad(xf, (0, pad))
        yf = jnp.pad(yf, (0, pad))
    x2d = xf.reshape(rows_padded, cols)
    y2d = yf.reshape(rows_padded, cols)

    grid = (rows_padded // rb,)

    out2d = pl.pallas_call(
        _add_kernel,
        out_shape=jax.ShapeDtypeStruct((rows_padded, cols), out_dtype),
        grid_spec=pltpu.PrefetchScalarGridSpec(
            num_scalar_prefetch=0,
            grid=grid,
            in_specs=[
                pl.BlockSpec((rb, cols), lambda i: (i, 0)),
                pl.BlockSpec((rb, cols), lambda i: (i, 0)),
            ],
            out_specs=pl.BlockSpec((rb, cols), lambda i: (i, 0)),
        ),
        compiler_params=pltpu.CompilerParams(
            dimension_semantics=("parallel",),   # disjoint blocks -> megacore-shardable on v7x
        ),
    )(x2d, y2d)

    return out2d.reshape(-1)[:total].reshape(orig_shape)


if __name__ == "__main__":
    # Small shapes consistent with the module: batch=2, channels=4, spatial=16.
    N, C, H, W = 2, 4, 16, 16

    key = jax.random.PRNGKey(0)
    kx, ky = jax.random.split(key, 2)
    x = jax.random.normal(kx, (N, C, H, W), dtype=jnp.float32)
    y = jax.random.normal(ky, (N, C, H, W), dtype=jnp.float32)

    out = add_forward(x, y)
    out = jax.block_until_ready(out)

    ref = x + y
    assert out.shape == ref.shape
    assert out.dtype == ref.dtype
    assert jnp.allclose(out, ref, rtol=1e-6, atol=1e-6), "Add mismatch"

    # Also exercise a shape whose flat size is NOT a multiple of the block (pad path).
    x2 = jax.random.normal(kx, (3, 5, 7), dtype=jnp.float32)
    y2 = jax.random.normal(ky, (3, 5, 7), dtype=jnp.float32)
    out2 = jax.block_until_ready(add_forward(x2, y2))
    assert jnp.allclose(out2, x2 + y2, rtol=1e-6, atol=1e-6), "Add (padded path) mismatch"

    print("KERNEL_OK")
</pallas_src>

<mosaic_0001>
module attributes {stable_mosaic.version = 11 : i64} {
  func.func @_add_kernel(%arg0: i32, %arg1: memref<2x1024xf32, #tpu.memory_space<vmem>>, %arg2: memref<2x1024xf32, #tpu.memory_space<vmem>>, %arg3: memref<2x1024xf32, #tpu.memory_space<vmem>>) attributes {dimension_semantics = [#tpu.dimension_semantics<parallel>], iteration_bounds = array<i64: 1>, scalar_prefetch = 0 : i64, scratch_operands = 0 : i64, tpu.core_type = #tpu.core_type<tc>, window_params = [{transform_indices = @transform_0, window_bounds = array<i64: 2, 1024>}, {transform_indices = @transform_1, window_bounds = array<i64: 2, 1024>}, {transform_indices = @transform_2, window_bounds = array<i64: 2, 1024>}]} {
    %c0 = arith.constant 0 : index
    %c0_0 = arith.constant 0 : index
    %0 = vector.load %arg1[%c0, %c0_0] : memref<2x1024xf32, #tpu.memory_space<vmem>>, vector<2x1024xf32>
    %c0_1 = arith.constant 0 : index
    %c0_2 = arith.constant 0 : index
    %1 = vector.load %arg2[%c0_1, %c0_2] : memref<2x1024xf32, #tpu.memory_space<vmem>>, vector<2x1024xf32>
    %2 = arith.addf %0, %1 : vector<2x1024xf32>
    %c0_3 = arith.constant 0 : index
    %c0_4 = arith.constant 0 : index
    %3 = vector.load %arg3[%c0_3, %c0_4] : memref<2x1024xf32, #tpu.memory_space<vmem>>, vector<2x1024xf32>
    tpu.vector_store %arg3[%c0_3, %c0_4], %2 {strides = array<i32>} : memref<2x1024xf32, #tpu.memory_space<vmem>>, vector<2x1024xf32>,
    return
  }
  func.func @transform_0(%arg0: i32) -> (i32, i32) {
    %c0_i32 = arith.constant 0 : i32
    %c0_i32_0 = arith.constant 0 : i32
    return %arg0, %c0_i32 : i32, i32
  }
  func.func @transform_1(%arg0: i32) -> (i32, i32) {
    %c0_i32 = arith.constant 0 : i32
    %c0_i32_0 = arith.constant 0 : i32
    return %arg0, %c0_i32 : i32, i32
  }
  func.func @transform_2(%arg0: i32) -> (i32, i32) {
    %c0_i32 = arith.constant 0 : i32
    %c0_i32_0 = arith.constant 0 : i32
    return %arg0, %c0_i32 : i32, i32
  }
}

</mosaic_0001>

<llo_original>
// kernel: tpu_custom_call.1
$region0: #{tpu_custom_call.1}
  #allocation0 [shape = 'u32[]', space=smem, size = 0x4, offset = 0x4, fixed_abs, tag = 'smem constant byte address 0x4 - core index']
  #allocation1 [shape = 'u32[144,128]{1,0:T(1,128)}', space=vmem, size = 0x12000, scoped, tag = 'internal scratch']
  %s0 = inlined_call_operand.hbm [shape: f32[2,1024], index: 0, kind: input, shape index: {}]
  %s1 = inlined_call_operand.hbm [shape: f32[2,1024], index: 1, kind: input, shape index: {}]
  %s2 = inlined_call_operand.hbm [shape: f32[2,1024], index: 2, kind: output, shape index: {}]
  %s3 = sld [smem:[#allocation0]]
  $region26: #{tpu_custom_call.1} parent=0
    _
  %s5 = ssub.s32 1, %s3
  %s6 = scalar_select 0, %s5, %s3
  $region1: #{tpu_custom_call.1} parent=0
    #allocation2 [shape = 'u8[8192]{0}', space=vmem, size = 0x2000, scoped, tag = 'input window, operand 0, single buffered']
    #allocation3 [shape = 's32[1]{0}', space=sflag, size = 0x4, scoped, tag = 'scoped memory for tpu_custom_call.1']
    #allocation4 [shape = 's32[1]{0}', space=sflag, size = 0x4, scoped, tag = 'scoped memory for tpu_custom_call.1']
    #allocation5 [shape = 'u8[8192]{0}', space=vmem, size = 0x2000, scoped, tag = 'input window, operand 1, single buffered']
    #allocation6 [shape = 's32[1]{0}', space=sflag, size = 0x4, scoped, tag = 'scoped memory for tpu_custom_call.1']
    #allocation7 [shape = 'u8[8192]{0}', space=vmem, size = 0x2000, scoped, tag = 'output window, operand 0, single buffered']
    %7 = vsyncpa [#allocation3], 0
    %8 = vsyncpa [#allocation6], 0
    %9 = vsyncpa [#allocation4], 0
    // Predicated region
    $region2: #{tpu_custom_call.1} parent=1 // pred_check
      _
    $region3: #{tpu_custom_call.1} parent=1 // pred_check_branch
      %11 = sbr.rel (0) target = $region5
    $region4: #{tpu_custom_call.1} parent=1 // pred_region
      %s13 = ssub.s32 256, 256
      %14 = vsyncadd [#allocation3], %s13
      %s16 = sshll.u32 [#allocation2], 4
      %s17 = int_to_ptr.vmem [resolvable:$true] %s16
      %19 = dma.hbm_to_vmem [thread:$0]  %s0, 256, %s17, [#allocation3]
    $region5: #{tpu_custom_call.1} parent=1 // pred_fallthru
      _
    // Predicated region
    $region6: #{tpu_custom_call.1} parent=1 // pred_check
      _
    $region7: #{tpu_custom_call.1} parent=1 // pred_check_branch
      %21 = sbr.rel (0) target = $region9
    $region8: #{tpu_custom_call.1} parent=1 // pred_region
      %s23 = ssub.s32 256, 256
      %24 = vsyncadd [#allocation6], %s23
      %s26 = sshll.u32 [#allocation5], 4
      %s27 = int_to_ptr.vmem [resolvable:$true] %s26
      %29 = dma.hbm_to_vmem [thread:$0]  %s1, 256, %s27, [#allocation6]
    $region9: #{tpu_custom_call.1} parent=1 // pred_fallthru
      _
    // Predicated region
    $region10: #{tpu_custom_call.1} parent=1 // pred_check
      _
    $region11: #{tpu_custom_call.1} parent=1 // pred_check_branch
      %31 = sbr.rel (0) target = $region13
    $region12: #{tpu_custom_call.1} parent=1 // pred_region
      %32 = dma.done [#allocation3], 256
    $region13: #{tpu_custom_call.1} parent=1 // pred_fallthru
      _
    // Predicated region
    $region14: #{tpu_custom_call.1} parent=1 // pred_check
      _
    $region15: #{tpu_custom_call.1} parent=1 // pred_check_branch
      %34 = sbr.rel (0) target = $region17
    $region16: #{tpu_custom_call.1} parent=1 // pred_region
      %35 = dma.done [#allocation6], 256
    $region17: #{tpu_custom_call.1} parent=1 // pred_fallthru
      _
    %v36 = vld [vmem:[#allocation2] sm:$0xff]
    %v37 = vld [vmem:[#allocation2 + $0x8] sm:$0xff]
    %v38 = vld [vmem:[#allocation5] sm:$0xff]
    %v39 = vld [vmem:[#allocation5 + $0x8] sm:$0xff]
    %v40 = vadd.f32 %v36, %v38
    %v41 = vadd.f32 %v37, %v39
    %42 = vst [vmem:[#allocation7] sm:$0xff] %v40
    %43 = vst [vmem:[#allocation7 + $0x8] sm:$0xff] %v41
    // Predicated region
    $region18: #{tpu_custom_call.1} parent=1 // pred_check
      _
    $region19: #{tpu_custom_call.1} parent=1 // pred_check_branch
      %45 = sbr.rel (0) target = $region21
    $region20: #{tpu_custom_call.1} parent=1 // pred_region
      %s47 = ssub.s32 256, 256
      %48 = vsyncadd [#allocation4], %s47
      %s50 = sshll.u32 [#allocation7], 4
      %s51 = int_to_ptr.vmem [resolvable:$true] %s50
      %53 = dma.vmem_to_hbm [thread:$0]  %s51, 256, %s2, [#allocation4]
    $region21: #{tpu_custom_call.1} parent=1 // pred_fallthru
      _
    // Predicated region
    $region22: #{tpu_custom_call.1} parent=1 // pred_check
      _
    $region23: #{tpu_custom_call.1} parent=1 // pred_check_branch
      %55 = sbr.rel (0) target = $region25
    $region24: #{tpu_custom_call.1} parent=1 // pred_region
      %56 = dma.done [#allocation4], 256
    $region25: #{tpu_custom_call.1} parent=1 // pred_fallthru
      _
    %57 = vsyncpa [#allocation3], 1
    %58 = vsyncpa [#allocation6], 1
    %59 = vsyncpa [#allocation4], 1

</llo_original>
